<compile_context>
chip_gen: v5e
topology: v5e:2x2
jax: 0.10.0
libtpu: 0.0.40
codegen_flags: <defaults>
</compile_context>

<pallas_src>
import jax
import jax.numpy as jnp
from jax.experimental import pallas as pl
from jax.experimental.pallas import tpu as pltpu


def _se_kernel(x_ref, w1_ref, w2_ref, out_ref):
    # x_ref / out_ref: (TB, C, HW) block (NCHW with spatial flattened), native dtype.
    # w1_ref: (C, hid), w2_ref: (hid, C) — tiny, VMEM-resident across grid steps.
    x = x_ref[...]                                         # (TB, C, HW) native dtype
    hw = x.shape[-1]
    inv_hw = jnp.float32(1.0 / hw)

    # AdaptiveAvgPool2d(1): mean over the spatial (lane) axis, f32 accumulation,
    # without materializing a full-tile f32 copy of x.
    p = jnp.sum(x, axis=-1, dtype=jnp.float32) * inv_hw    # (TB, C) f32

    # fc1 (no bias) -> ReLU -> fc2 (no bias) -> Sigmoid.  Tiny matmuls, f32 accum.
    h = jnp.maximum(
        jnp.dot(p.astype(w1_ref.dtype), w1_ref[...],
                preferred_element_type=jnp.float32), 0.0)  # (TB, hid)
    y = jax.nn.sigmoid(
        jnp.dot(h.astype(w2_ref.dtype), w2_ref[...],
                preferred_element_type=jnp.float32))       # (TB, C)

    # Channel gate: cast only the (TB, C) gate down, broadcast over HW lanes,
    # multiply in the native dtype (single packed pass for bf16 inputs).
    out_ref[...] = x * y.astype(x.dtype)[:, :, None]


def se_layer(x, w1, w2, *, vmem_tile_budget_bytes=24 << 20):
    """SELayer forward.

    x : (B, C, H, W) NCHW, any float dtype (kept native through HBM).
    w1: (C // r, C)  fc1 weight (nn.Linear, bias=False).
    w2: (C, C // r)  fc2 weight (nn.Linear, bias=False).
    """
    B, C, H, W = x.shape
    HW = H * W
    hid = w1.shape[0]

    # NCHW kept as-is; only a free reshape to (B, C, HW).  HW sits on lanes.
    # TODO(synk): if HW is not a multiple of 128 (e.g. 7x7 feature maps), stores
    # become masked vst.msk; pad/repack the spatial axis to 128 for full rate.
    x_l = x.reshape(B, C, HW)

    # Pre-transpose the tiny fc weights; keep their native dtype (MXU is
    # bf16-native, f32 weights also fine for these tiny tiles).
    w1_t = jnp.transpose(w1)      # (C, hid)
    w2_t = jnp.transpose(w2)      # (hid, C)

    # Choose TB (batch elements per grid step) from a VMEM budget:
    # in + out tiles, each double-buffered by the pipeline.
    itemsize = jnp.dtype(x.dtype).itemsize
    per_b = 4 * C * HW * itemsize                    # 2 bufs * (in + out) per image
    tb = max(1, min(B, vmem_tile_budget_bytes // max(per_b, 1)))
    # Keep the grid at least 2 steps (ideally >= 8) so the pipeline warms up and
    # v7x's two TensorCores both get work.
    min_steps = 8 if B >= 8 else (2 if B >= 2 else 1)
    tb = max(1, min(tb, pl.cdiv(B, min_steps)))

    # Pad the batch so it divides evenly into TB-sized steps.
    Bp = pl.cdiv(B, tb) * tb
    if Bp != B:
        x_l = jnp.pad(x_l, ((0, Bp - B), (0, 0), (0, 0)))
    nsteps = Bp // tb

    weight_bytes = (C * hid + hid * C) * jnp.dtype(w1.dtype).itemsize
    vmem_limit = min(int(per_b * tb + 2 * weight_bytes + (8 << 20)), 48 << 20)

    out_l = pl.pallas_call(
        _se_kernel,
        out_shape=jax.ShapeDtypeStruct((Bp, C, HW), x.dtype),
        grid_spec=pltpu.PrefetchScalarGridSpec(
            num_scalar_prefetch=0,
            grid=(nsteps,),
            in_specs=[
                # Per-step activation tile, double-buffered by the pipeline.
                pl.BlockSpec((tb, C, HW), lambda b: (b, 0, 0)),
                # Weights: constant index_map -> DMA'd once, VMEM-resident.
                pl.BlockSpec((C, hid), lambda b: (0, 0)),
                pl.BlockSpec((hid, C), lambda b: (0, 0)),
            ],
            out_specs=pl.BlockSpec((tb, C, HW), lambda b: (b, 0, 0)),
        ),
        compiler_params=pltpu.CompilerParams(
            # Batch steps are independent: shard across TensorCores on v7x.
            dimension_semantics=("parallel",),
            vmem_limit_bytes=vmem_limit,
        ),
    )(x_l, w1_t, w2_t)

    if Bp != B:
        out_l = out_l[:B]
    return out_l.reshape(B, C, H, W)


def _reference(x, w1, w2):
    p = jnp.mean(x.astype(jnp.float32), axis=(2, 3))
    y = jax.nn.sigmoid(jax.nn.relu(p @ w1.T) @ w2.T)
    return x.astype(jnp.float32) * y[:, :, None, None]


if __name__ == "__main__":
    # Module config: channel=128, reduction=16 -> hidden = 8
    B, C, H, W = 2, 128, 16, 16
    reduction = 16
    hid = C // reduction

    key = jax.random.PRNGKey(0)
    k1, k2, k3 = jax.random.split(key, 3)

    x = jax.random.normal(k1, (B, C, H, W), dtype=jnp.float32)
    # nn.Linear weights are (out_features, in_features), bias=False.
    w1 = 0.1 * jax.random.normal(k2, (hid, C), dtype=jnp.float32)   # fc1
    w2 = 0.1 * jax.random.normal(k3, (C, hid), dtype=jnp.float32)   # fc2

    # f32 path: tight check against the pure-JAX reference.
    out = jax.block_until_ready(se_layer(x, w1, w2))
    ref = _reference(x, w1, w2)
    assert out.shape == (B, C, H, W)
    assert jnp.allclose(out, ref, atol=1e-5, rtol=1e-5), "f32 mismatch vs reference"

    # bf16 native-dtype path: HBM bytes halved, pool still accumulates in f32,
    # gate multiply runs packed in bf16 (gate rounded to bf16 first).
    x_bf16 = x.astype(jnp.bfloat16)
    out_bf = jax.block_until_ready(se_layer(x_bf16, w1, w2))
    assert out_bf.dtype == jnp.bfloat16
    ref_bf = _reference(x_bf16.astype(jnp.float32), w1, w2)
    assert jnp.allclose(out_bf.astype(jnp.float32), ref_bf, atol=3e-2, rtol=3e-2), \
        "bf16 mismatch vs reference"

    print("KERNEL_OK")
</pallas_src>

<mosaic_0001>
module attributes {stable_mosaic.version = 11 : i64} {
  func.func @_se_kernel(%arg0: i32, %arg1: memref<1x128x256xf32, #tpu.memory_space<vmem>>, %arg2: memref<128x8xf32, #tpu.memory_space<vmem>>, %arg3: memref<8x128xf32, #tpu.memory_space<vmem>>, %arg4: memref<1x128x256xf32, #tpu.memory_space<vmem>>) attributes {dimension_semantics = [#tpu.dimension_semantics<parallel>], iteration_bounds = array<i64: 2>, scalar_prefetch = 0 : i64, scratch_operands = 0 : i64, tpu.core_type = #tpu.core_type<tc>, window_params = [{transform_indices = @transform_0, window_bounds = array<i64: 1, 128, 256>}, {pipeline_mode = #tpu.pipeline_mode<synchronous>, transform_indices = @transform_1, window_bounds = array<i64: 128, 8>}, {pipeline_mode = #tpu.pipeline_mode<synchronous>, transform_indices = @transform_2, window_bounds = array<i64: 8, 128>}, {transform_indices = @transform_3, window_bounds = array<i64: 1, 128, 256>}]} {
    %c0 = arith.constant 0 : index
    %c0_0 = arith.constant 0 : index
    %c0_1 = arith.constant 0 : index
    %0 = vector.load %arg1[%c0, %c0_0, %c0_1] : memref<1x128x256xf32, #tpu.memory_space<vmem>>, vector<1x128x256xf32>
    %cst = arith.constant dense<0.000000e+00> : vector<1x128xf32>
    %1 = vector.multi_reduction <add>, %0, %cst [2] : vector<1x128x256xf32> to vector<1x128xf32>
    %cst_2 = arith.constant 3.906250e-03 : f32
    %2 = vector.broadcast %cst_2 : f32 to vector<1x128xf32>
    %3 = arith.mulf %1, %2 : vector<1x128xf32>
    %c0_3 = arith.constant 0 : index
    %c0_4 = arith.constant 0 : index
    %4 = vector.load %arg2[%c0_3, %c0_4] : memref<128x8xf32, #tpu.memory_space<vmem>>, vector<128x8xf32>
    %cst_5 = arith.constant dense<0.000000e+00> : vector<1x8xf32>
    %5 = tpu.matmul %3, %4, %cst_5 {dimension_numbers = #tpu.dot_dimension_numbers<[1], [0], [0], [1], [0, 0, 1, 1], [], []>} : vector<1x128xf32>, vector<128x8xf32>, vector<1x8xf32> -> vector<1x8xf32>
    %cst_6 = arith.constant 0.000000e+00 : f32
    %6 = vector.broadcast %cst_6 : f32 to vector<1x8xf32>
    %7 = arith.maximumf %5, %6 : vector<1x8xf32>
    %c0_7 = arith.constant 0 : index
    %c0_8 = arith.constant 0 : index
    %8 = vector.load %arg3[%c0_7, %c0_8] : memref<8x128xf32, #tpu.memory_space<vmem>>, vector<8x128xf32>
    %cst_9 = arith.constant dense<0.000000e+00> : vector<1x128xf32>
    %9 = tpu.matmul %7, %8, %cst_9 {dimension_numbers = #tpu.dot_dimension_numbers<[1], [0], [0], [1], [0, 0, 1, 1], [], []>} : vector<1x8xf32>, vector<8x128xf32>, vector<1x128xf32> -> vector<1x128xf32>
    %10 = arith.negf %9 : vector<1x128xf32>
    %11 = math.exp %10 : vector<1x128xf32>
    %cst_10 = arith.constant 1.000000e+00 : f32
    %12 = vector.broadcast %cst_10 : f32 to vector<1x128xf32>
    %13 = arith.addf %12, %11 : vector<1x128xf32>
    %14 = arith.divf %12, %13 : vector<1x128xf32>
    %15 = vector.shape_cast %14 : vector<1x128xf32> to vector<1x128x1xf32>
    %16 = vector.broadcast %15 : vector<1x128x1xf32> to vector<1x128x256xf32>
    %17 = arith.mulf %0, %16 : vector<1x128x256xf32>
    %c0_11 = arith.constant 0 : index
    %c0_12 = arith.constant 0 : index
    %c0_13 = arith.constant 0 : index
    %18 = vector.load %arg4[%c0_11, %c0_12, %c0_13] : memref<1x128x256xf32, #tpu.memory_space<vmem>>, vector<1x128x256xf32>
    tpu.vector_store %arg4[%c0_11, %c0_12, %c0_13], %17 {strides = array<i32>} : memref<1x128x256xf32, #tpu.memory_space<vmem>>, vector<1x128x256xf32>,
    return
  }
  func.func @transform_0(%arg0: i32) -> (i32, i32, i32) {
    %c0_i32 = arith.constant 0 : i32
    %c0_i32_0 = arith.constant 0 : i32
    %c0_i32_1 = arith.constant 0 : i32
    return %arg0, %c0_i32, %c0_i32_0 : i32, i32, i32
  }
  func.func @transform_1(%arg0: i32) -> (i32, i32) {
    %c0_i32 = arith.constant 0 : i32
    %c0_i32_0 = arith.constant 0 : i32
    %c0_i32_1 = arith.constant 0 : i32
    return %c0_i32, %c0_i32_0 : i32, i32
  }
  func.func @transform_2(%arg0: i32) -> (i32, i32) {
    %c0_i32 = arith.constant 0 : i32
    %c0_i32_0 = arith.constant 0 : i32
    %c0_i32_1 = arith.constant 0 : i32
    return %c0_i32, %c0_i32_0 : i32, i32
  }
  func.func @transform_3(%arg0: i32) -> (i32, i32, i32) {
    %c0_i32 = arith.constant 0 : i32
    %c0_i32_0 = arith.constant 0 : i32
    %c0_i32_1 = arith.constant 0 : i32
    return %arg0, %c0_i32, %c0_i32_0 : i32, i32, i32
  }
}

</mosaic_0001>

<llo_original>
// kernel: tpu_custom_call.1
$region0: #{tpu_custom_call.1}
  #allocation0 [shape = 'u32[]', space=smem, size = 0x4, offset = 0x4, fixed_abs, tag = 'smem constant byte address 0x4 - core index']
  #allocation1 [shape = 'u32[72,128]{1,0:T(1,128)}', space=vmem, size = 0x9000, scoped, tag = 'internal scratch']
  %s0 = inlined_call_operand.hbm [shape: f32[2,128,256], index: 0, kind: input, shape index: {}]
  %s1 = inlined_call_operand.vmem [shape: f32[128,8], index: 1, kind: input, shape index: {}]
  %s2 = inlined_call_operand.vmem [shape: f32[8,128], index: 2, kind: input, shape index: {}]
  %s3 = inlined_call_operand.hbm [shape: f32[2,128,256], index: 3, kind: output, shape index: {}]
  %s4 = sld [smem:[#allocation0]]
  $region49: #{tpu_custom_call.1} parent=0
    _
  %s6 = ssub.s32 1, %s4
  %s7 = scalar_select 0, %s6, %s4
  $region1: #{tpu_custom_call.1} parent=0
    #allocation2 [shape = 'u8[262144]{0}', space=vmem, size = 0x40000, scoped, tag = 'input window, operand 0']
    #allocation3 [shape = 's32[2]{0}', space=sflag, size = 0x8, scoped, tag = 'scoped memory for tpu_custom_call.1']
    #allocation4 [shape = 's32[2]{0}', space=sflag, size = 0x8, scoped, tag = 'scoped memory for tpu_custom_call.1']
    #allocation5 [shape = 'u8[262144]{0}', space=vmem, size = 0x40000, scoped, tag = 'output window, operand 0']
    %8 = vsyncpa [#allocation3], 0
    %s9 = scalar_lea.sflag [#allocation3], 1
    %10 = vsyncpa %s9, 0
    %11 = vsyncpa [#allocation4], 0
    %s12 = scalar_lea.sflag [#allocation4], 1
    %13 = vsyncpa %s12, 0
    loop: start=0, step=1, limit=4
    $region2: #{tpu_custom_call.1} parent=1 // loop_pre_header
      _
    $region3: #{tpu_custom_call.1} parent=1 // loop_header
      %s15 = sphi 0, %s19
      %p16 = scmp.ge.s32.totalorder %s15, 4
      %s25 = sphi 0, %s27
      %s28 = sphi 0, %s25
      %s29 = sphi 0, %s28
      %s45 = sphi 0, %s29
      %s49 = sphi 0, %s49
      %s51 = sphi 0, %s49
      %s52 = sphi 0, %s51
      %s66 = sphi 0, %s52
      %s70 = sphi 0, %s70
      %s72 = sphi 0, %s70
      %s73 = sphi 0, %s72
      %s87 = sphi 0, %s73
      %s93 = sphi 0, %s95
      %s96 = sphi 0, %s93
      %s97 = sphi 0, %s96
      %s113 = sphi 0, %s97
    $region4: #{tpu_custom_call.1} parent=1 // loop_header_branch
      %18 = sbr.rel (%p16) target = $region8
    $region5: #{tpu_custom_call.1} parent=1 // loop_body
      %s20 = ssub.s32 %s15, 1
      %s21 = ssub.s32 %s15, 2
      %s22 = sadd.s32 %s15, 1
      %s23 = ssub.s32 %s15, %s22
      %p24 = scmp.eq.s32.totalorder %s23, 0
      %s26 = sadd.s32 %s25, 1
      %s27 = scalar_select %p24, %s25, %s26
      %p30 = pneg %p24
      %p31 = scmp.eq.s32.totalorder %s15, 1
      %p32 = por %p30, %p31
      %p33 = scmp.ne.s32.totalorder %s25, %s28
      %p34 = scmp.eq.s32.totalorder %s15, 0
      %p35 = por %p33, %p34
      %p36 = scmp.ne.s32.totalorder %s25, %s28
      %p37 = scmp.eq.s32.totalorder %s20, 1
      %p38 = por %p36, %p37
      %p39 = scmp.ne.s32.totalorder %s28, %s29
      %p40 = scmp.eq.s32.totalorder %s20, 0
      %p41 = por %p39, %p40
      %p42 = scmp.ne.s32.totalorder %s28, %s29
      %p43 = scmp.eq.s32.totalorder %s21, 1
      %p44 = por %p42, %p43
      %p46 = scmp.ne.s32.totalorder %s29, %s45
      %p47 = scmp.eq.s32.totalorder %s21, 0
      %p48 = por %p46, %p47
      %s50 = sadd.s32 %s49, 1
      %p53 = scmp.eq.s32.totalorder %s15, 1
      %p54 = scmp.ne.s32.totalorder %s49, %s51
      %p55 = scmp.eq.s32.totalorder %s15, 0
      %p56 = por %p54, %p55
      %p57 = scmp.ne.s32.totalorder %s49, %s51
      %p58 = scmp.eq.s32.totalorder %s20, 1
      %p59 = por %p57, %p58
      %p60 = scmp.ne.s32.totalorder %s51, %s52
      %p61 = scmp.eq.s32.totalorder %s20, 0
      %p62 = por %p60, %p61
      %p63 = scmp.ne.s32.totalorder %s51, %s52
      %p64 = scmp.eq.s32.totalorder %s21, 1
      %p65 = por %p63, %p64
      %p67 = scmp.ne.s32.totalorder %s52, %s66
      %p68 = scmp.eq.s32.totalorder %s21, 0
      %p69 = por %p67, %p68
      %s71 = sadd.s32 %s70, 1
      %p74 = scmp.eq.s32.totalorder %s15, 1
      %p75 = scmp.ne.s32.totalorder %s70, %s72
      %p76 = scmp.eq.s32.totalorder %s15, 0
      %p77 = por %p75, %p76
      %p78 = scmp.ne.s32.totalorder %s70, %s72
      %p79 = scmp.eq.s32.totalorder %s20, 1
      %p80 = por %p78, %p79
      %p81 = scmp.ne.s32.totalorder %s72, %s73
      %p82 = scmp.eq.s32.totalorder %s20, 0
      %p83 = por %p81, %p82
      %p84 = scmp.ne.s32.totalorder %s72, %s73
      %p85 = scmp.eq.s32.totalorder %s21, 1
      %p86 = por %p84, %p85
      %p88 = scmp.ne.s32.totalorder %s73, %s87
      %p89 = scmp.eq.s32.totalorder %s21, 0
      %p90 = por %p88, %p89
      %s91 = ssub.s32 %s15, %s22
      %p92 = scmp.eq.s32.totalorder %s91, 0
      %s94 = sadd.s32 %s93, 1
      %s95 = scalar_select %p92, %s93, %s94
      %p98 = pneg %p92
      %p99 = scmp.eq.s32.totalorder %s15, 1
      %p100 = por %p98, %p99
      %p101 = scmp.ne.s32.totalorder %s93, %s96
      %p102 = scmp.eq.s32.totalorder %s15, 0
      %p103 = por %p101, %p102
      %p104 = scmp.ne.s32.totalorder %s93, %s96
      %p105 = scmp.eq.s32.totalorder %s20, 1
      %p106 = por %p104, %p105
      %p107 = scmp.ne.s32.totalorder %s96, %s97
      %p108 = scmp.eq.s32.totalorder %s20, 0
      %p109 = por %p107, %p108
      %p110 = scmp.ne.s32.totalorder %s96, %s97
      %p111 = scmp.eq.s32.totalorder %s21, 1
      %p112 = por %p110, %p111
      %p114 = scmp.ne.s32.totalorder %s97, %s113
      %p115 = scmp.eq.s32.totalorder %s21, 0
      %p116 = por %p114, %p115
      %p117 = scmp.le.s32.totalorder 1, %s15
      %p118 = scmp.lt.s32.totalorder %s15, 3
      %p119 = pnand %p117, %p118
      %p120 = pneg %p119
      // Predicated region
      $region9: #{tpu_custom_call.1} parent=5 // pred_check
        _
      $region10: #{tpu_custom_call.1} parent=5 // pred_check_branch
        %122 = sbr.rel (%p119) target = $region12
      $region11: #{tpu_custom_call.1} parent=5 // pred_region
        %s123 = ssub.s32 %s15, 1
        // Predicated region
        $region13: #{tpu_custom_call.1} parent=11 // pred_check
          %p124 = pneg %p62
        $region14: #{tpu_custom_call.1} parent=11 // pred_check_branch
          %126 = sbr.rel (%p124) target = $region16
        $region15: #{tpu_custom_call.1} parent=11 // pred_region
          _
        $region16: #{tpu_custom_call.1} parent=11 // pred_fallthru
          _
        // Predicated region
        $region17: #{tpu_custom_call.1} parent=11 // pred_check
          %p127 = pneg %p83
        $region18: #{tpu_custom_call.1} parent=11 // pred_check_branch
          %129 = sbr.rel (%p127) target = $region20
        $region19: #{tpu_custom_call.1} parent=11 // pred_region
          _
        $region20: #{tpu_custom_call.1} parent=11 // pred_fallthru
          _
      $region12: #{tpu_custom_call.1} parent=5 // pred_fallthru
        _
      %p130 = scmp.lt.s32.totalorder %s15, 2
      // Predicated region
      $region21: #{tpu_custom_call.1} parent=5 // pred_check
        %p131 = pneg %p130
      $region22: #{tpu_custom_call.1} parent=5 // pred_check_branch
        %133 = sbr.rel (%p131) target = $region24
      $region23: #{tpu_custom_call.1} parent=5 // pred_region
        // Predicated region
        $region25: #{tpu_custom_call.1} parent=23 // pred_check
          %p134 = pneg %p35
        $region26: #{tpu_custom_call.1} parent=23 // pred_check_branch
          %136 = sbr.rel (%p134) target = $region28
        $region27: #{tpu_custom_call.1} parent=23 // pred_region
          %s137 = sand.u32 %s25, 1
          %s138 = scalar_lea.sflag [#allocation3], %s137
          %s139 = sand.u32 %s25, 1
          %s140 = smul.addr %s139, 256
          %s141 = scalar_lea.vmem [#allocation2], %s140
          %143 = vsyncadd %s138, 0
          %s144 = smul.addr %s15, 32
          %s145 = smul.addr %s144, 8
          %s146 = scalar_lea.hbm %s0, %s145
          %s147 = sshll.u32 %s146, 4
          %s148 = int_to_ptr.hbm [resolvable:$true] %s147
          %s149 = sshll.u32 %s141, 4
          %s150 = int_to_ptr.vmem [resolvable:$true] %s149
          %155 = dma.hbm_to_vmem [thread:$0]  %s148, 4096, %s150, %s138, 256, 256, 16
        $region28: #{tpu_custom_call.1} parent=23 // pred_fallthru
          _
      $region24: #{tpu_custom_call.1} parent=5 // pred_fallthru
        _
      %p156 = scmp.le.s32.totalorder 1, %s15
      %p157 = scmp.lt.s32.totalorder %s15, 3
      %p158 = pnand %p156, %p157
      %p159 = pneg %p158
      // Predicated region
      $region29: #{tpu_custom_call.1} parent=5 // pred_check
        _
      $region30: #{tpu_custom_call.1} parent=5 // pred_check_branch
        %161 = sbr.rel (%p158) target = $region32
      $region31: #{tpu_custom_call.1} parent=5 // pred_region
        %s162 = ssub.s32 %s15, 1
        %s163 = sand.u32 %s28, 1
        %s164 = scalar_lea.sflag [#allocation3], %s163
        %s165 = sand.u32 %s28, 1
        %s166 = smul.addr %s165, 256
        %s167 = scalar_lea.vmem [#allocation2], %s166
        // Predicated region
        $region33: #{tpu_custom_call.1} parent=31 // pred_check
          %p168 = pneg %p41
        $region34: #{tpu_custom_call.1} parent=31 // pred_check_branch
          %170 = sbr.rel (%p168) target = $region36
        $region35: #{tpu_custom_call.1} parent=31 // pred_region
          %172 = dma.done %s164, 4096
        $region36: #{tpu_custom_call.1} parent=31 // pred_fallthru
          _
        %s173 = sand.u32 %s28, 1
        %s174 = scalar_lea.sflag [#allocation3], %s173
        %s175 = sand.u32 %s28, 1
        %s176 = smul.addr %s175, 256
        %s177 = scalar_lea.vmem [#allocation2], %s176
        %p178 = pneg %p41
        %p179 = pneg %p38
        %p180 = pneg %p62
        %p181 = pneg %p59
        %p182 = pneg %p83
        %p183 = pneg %p80
        %p184 = pneg %p109
        %p185 = pneg %p106
        %s186 = sand.u32 %s96, 1
        %s187 = scalar_lea.sflag [#allocation4], %s186
        %s188 = sand.u32 %s96, 1
        %s189 = smul.addr %s188, 256
        %s190 = scalar_lea.vmem [#allocation5], %s189
        %v191 = vld [vmem:[%s167] sm:$0xff]
        %v192 = vld [vmem:[%s167 + $0x8] sm:$0xff]
        %v193 = vld [vmem:[%s167 + $0x10] sm:$0xff]
        %v194 = vld [vmem:[%s167 + $0x18] sm:$0xff]
        %v195 = vld [vmem:[%s167 + $0x20] sm:$0xff]
        %v196 = vld [vmem:[%s167 + $0x28] sm:$0xff]
        %v197 = vld [vmem:[%s167 + $0x30] sm:$0xff]
        %v198 = vld [vmem:[%s167 + $0x38] sm:$0xff]
        %v199 = vld [vmem:[%s167 + $0x40] sm:$0xff]
        %v200 = vld [vmem:[%s167 + $0x48] sm:$0xff]
        %v201 = vld [vmem:[%s167 + $0x50] sm:$0xff]
        %v202 = vld [vmem:[%s167 + $0x58] sm:$0xff]
        %v203 = vld [vmem:[%s167 + $0x60] sm:$0xff]
        %v204 = vld [vmem:[%s167 + $0x68] sm:$0xff]
        %v205 = vld [vmem:[%s167 + $0x70] sm:$0xff]
        %v206 = vld [vmem:[%s167 + $0x78] sm:$0xff]
        %v207 = vld [vmem:[%s167 + $0x80] sm:$0xff]
        %v208 = vld [vmem:[%s167 + $0x88] sm:$0xff]
        %v209 = vld [vmem:[%s167 + $0x90] sm:$0xff]
        %v210 = vld [vmem:[%s167 + $0x98] sm:$0xff]
        %v211 = vld [vmem:[%s167 + $0xa0] sm:$0xff]
        %v212 = vld [vmem:[%s167 + $0xa8] sm:$0xff]
        %v213 = vld [vmem:[%s167 + $0xb0] sm:$0xff]
        %v214 = vld [vmem:[%s167 + $0xb8] sm:$0xff]
        %v215 = vld [vmem:[%s167 + $0xc0] sm:$0xff]
        %v216 = vld [vmem:[%s167 + $0xc8] sm:$0xff]
        %v217 = vld [vmem:[%s167 + $0xd0] sm:$0xff]
        %v218 = vld [vmem:[%s167 + $0xd8] sm:$0xff]
        %v219 = vld [vmem:[%s167 + $0xe0] sm:$0xff]
        %v220 = vld [vmem:[%s167 + $0xe8] sm:$0xff]
        %v221 = vld [vmem:[%s167 + $0xf0] sm:$0xff]
        %v222 = vld [vmem:[%s167 + $0xf8] sm:$0xff]
        %v223 = vadd.f32 %v191, %v192
        %224 = vadd.xlane.f32.xlu0 %v223
        %v225 = vpop.xlane.xlu0 %224
        %v226 = vadd.f32 %v193, %v194
        %227 = vadd.xlane.f32.xlu0 %v226
        %v228 = vpop.xlane.xlu0 %227
        %v229 = vadd.f32 %v195, %v196
        %230 = vadd.xlane.f32.xlu0 %v229
        %v231 = vpop.xlane.xlu0 %230
        %v232 = vadd.f32 %v197, %v198
        %233 = vadd.xlane.f32.xlu0 %v232
        %v234 = vpop.xlane.xlu0 %233
        %v235 = vadd.f32 %v199, %v200
        %236 = vadd.xlane.f32.xlu0 %v235
        %v237 = vpop.xlane.xlu0 %236
        %v238 = vadd.f32 %v201, %v202
        %239 = vadd.xlane.f32.xlu0 %v238
        %v240 = vpop.xlane.xlu0 %239
        %v241 = vadd.f32 %v203, %v204
        %242 = vadd.xlane.f32.xlu0 %v241
        %v243 = vpop.xlane.xlu0 %242
        %v244 = vadd.f32 %v205, %v206
        %245 = vadd.xlane.f32.xlu0 %v244
        %v246 = vpop.xlane.xlu0 %245
        %v247 = vadd.f32 %v207, %v208
        %248 = vadd.xlane.f32.xlu0 %v247
        %v249 = vpop.xlane.xlu0 %248
        %v250 = vadd.f32 %v209, %v210
        %251 = vadd.xlane.f32.xlu0 %v250
        %v252 = vpop.xlane.xlu0 %251
        %v253 = vadd.f32 %v211, %v212
        %254 = vadd.xlane.f32.xlu0 %v253
        %v255 = vpop.xlane.xlu0 %254
        %v256 = vadd.f32 %v213, %v214
        %257 = vadd.xlane.f32.xlu0 %v256
        %v258 = vpop.xlane.xlu0 %257
        %v259 = vadd.f32 %v215, %v216
        %260 = vadd.xlane.f32.xlu0 %v259
        %v261 = vpop.xlane.xlu0 %260
        %v262 = vadd.f32 %v217, %v218
        %263 = vadd.xlane.f32.xlu0 %v262
        %v264 = vpop.xlane.xlu0 %263
        %v265 = vadd.f32 %v219, %v220
        %266 = vadd.xlane.f32.xlu0 %v265
        %v267 = vpop.xlane.xlu0 %266
        %v268 = vadd.f32 %v221, %v222
        %269 = vadd.xlane.f32.xlu0 %v268
        %v270 = vpop.xlane.xlu0 %269
        %v271 = vmul.f32 %v225, 0.00390625
        %v272 = vmul.f32 %v228, 0.00390625
        %v273 = vmul.f32 %v231, 0.00390625
        %v274 = vmul.f32 %v234, 0.00390625
        %v275 = vmul.f32 %v237, 0.00390625
        %v276 = vmul.f32 %v240, 0.00390625
        %v277 = vmul.f32 %v243, 0.00390625
        %v278 = vmul.f32 %v246, 0.00390625
        %v279 = vmul.f32 %v249, 0.00390625
        %v280 = vmul.f32 %v252, 0.00390625
        %v281 = vmul.f32 %v255, 0.00390625
        %v282 = vmul.f32 %v258, 0.00390625
        %v283 = vmul.f32 %v261, 0.00390625
        %v284 = vmul.f32 %v264, 0.00390625
        %v285 = vmul.f32 %v267, 0.00390625
        %v286 = vmul.f32 %v270, 0.00390625
        %v287 = vld [vmem:[%s1] sm:$0xff]
        %v288 = vld [vmem:[%s1 + $0x8] sm:$0xff]
        %v289 = vld [vmem:[%s1 + $0x10] sm:$0xff]
        %v290 = vld [vmem:[%s1 + $0x18] sm:$0xff]
        %v291 = vld [vmem:[%s1 + $0x20] sm:$0xff]
        %v292 = vld [vmem:[%s1 + $0x28] sm:$0xff]
        %v293 = vld [vmem:[%s1 + $0x30] sm:$0xff]
        %v294 = vld [vmem:[%s1 + $0x38] sm:$0xff]
        %v295 = vld [vmem:[%s1 + $0x40] sm:$0xff]
        %v296 = vld [vmem:[%s1 + $0x48] sm:$0xff]
        %v297 = vld [vmem:[%s1 + $0x50] sm:$0xff]
        %v298 = vld [vmem:[%s1 + $0x58] sm:$0xff]
        %v299 = vld [vmem:[%s1 + $0x60] sm:$0xff]
        %v300 = vld [vmem:[%s1 + $0x68] sm:$0xff]
        %v301 = vld [vmem:[%s1 + $0x70] sm:$0xff]
        %v302 = vld [vmem:[%s1 + $0x78] sm:$0xff]
        %v319 = vlaneseq
        %v320 = vand.u32 %v319, 127
        %v321 = vperm.slane %v271, %v320
        %v322 = vadd.s32 %v320, 4294967288
        %v323 = vperm.slane %v272, %v322
        %vm324 = vcmask 130112
        %v325 = vsel %vm324, %v323, %v321
        %v326 = vadd.s32 %v320, 4294967280
        %v327 = vperm.slane %v273, %v326
        %vm328 = vcmask 195712
        %v329 = vsel %vm328, %v327, %v325
        %v330 = vadd.s32 %v320, 4294967272
        %v331 = vperm.slane %v274, %v330
        %vm332 = vcmask 261312
        %v333 = vsel %vm332, %v331, %v329
        %v334 = vadd.s32 %v320, 4294967264
        %v335 = vperm.slane %v275, %v334
        %vm336 = vcmask 326912
        %v337 = vsel %vm336, %v335, %v333
        %v338 = vadd.s32 %v320, 4294967256
        %v339 = vperm.slane %v276, %v338
        %vm340 = vcmask 392512
        %v341 = vsel %vm340, %v339, %v337
        %v342 = vadd.s32 %v320, 4294967248
        %v343 = vperm.slane %v277, %v342
        %vm344 = vcmask 458112
        %v345 = vsel %vm344, %v343, %v341
        %v346 = vadd.s32 %v320, 4294967240
        %v347 = vperm.slane %v278, %v346
        %vm348 = vcmask 523712
        %v349 = vsel %vm348, %v347, %v345
        %v350 = vadd.s32 %v320, 4294967232
        %v351 = vperm.slane %v279, %v350
        %vm352 = vcmask 589312
        %v353 = vsel %vm352, %v351, %v349
        %v354 = vadd.s32 %v320, 4294967224
        %v355 = vperm.slane %v280, %v354
        %vm356 = vcmask 654912
        %v357 = vsel %vm356, %v355, %v353
        %v358 = vadd.s32 %v320, 4294967216
        %v359 = vperm.slane %v281, %v358
        %vm360 = vcmask 720512
        %v361 = vsel %vm360, %v359, %v357
        %v362 = vadd.s32 %v320, 4294967208
        %v363 = vperm.slane %v282, %v362
        %vm364 = vcmask 786112
        %v365 = vsel %vm364, %v363, %v361
        %v366 = vadd.s32 %v320, 4294967200
        %v367 = vperm.slane %v283, %v366
        %vm368 = vcmask 851712
        %v369 = vsel %vm368, %v367, %v365
        %v370 = vadd.s32 %v320, 4294967192
        %v371 = vperm.slane %v284, %v370
        %vm372 = vcmask 917312
        %v373 = vsel %vm372, %v371, %v369
        %v374 = vadd.s32 %v320, 4294967184
        %v375 = vperm.slane %v285, %v374
        %vm376 = vcmask 982912
        %v377 = vsel %vm376, %v375, %v373
        %v378 = vadd.s32 %v320, 4294967176
        %v379 = vperm.slane %v286, %v378
        %vm380 = vcmask 1048512
        %v381 = vsel %vm380, %v379, %v377
        %383 = vmatpush.msra.mxu0 %v302
        %384 = vmatpush.msra.mxu0 %v301
        %385 = vmatpush.msra.mxu0 %v300
        %386 = vmatpush.msra.mxu0 %v299
        %387 = vmatpush.msra.mxu0 %v298
        %388 = vmatpush.msra.mxu0 %v297
        %389 = vmatpush.msra.mxu0 %v296
        %390 = vmatpush.msra.mxu0 %v295
        %391 = vmatpush.msra.mxu0 %v294
        %392 = vmatpush.msra.mxu0 %v293
        %393 = vmatpush.msra.mxu0 %v292
        %394 = vmatpush.msra.mxu0 %v291
        %395 = vmatpush.msra.mxu0 %v290
        %396 = vmatpush.msra.mxu0 %v289
        %397 = vmatpush.msra.mxu0 %v288
        %398 = vmatpush.msra.mxu0 %v287
        %399 = vmatmul.f32.gmra.mxu0 %v381
        %v400 = vpop.f32.mrf.mxu0
        %v401 = vadd.f32 0.0, %v400
        %402 = vdwg.mxu0
        %v403 = vmax.f32 %v401, 0.0
        %v404 = vld [vmem:[%s2] sm:$0xff]
        %vm405 = vcmask 64512
        %v407 = vsel %vm405, %v403, 0
        %409 = vmatpush.msra.mxu0 0.0
        %410 = vmatpush.msra.mxu0 0.0
        %411 = vmatpush.msra.mxu0 0.0
        %412 = vmatpush.msra.mxu0 0.0
        %413 = vmatpush.msra.mxu0 0.0
        %414 = vmatpush.msra.mxu0 0.0
        %415 = vmatpush.msra.mxu0 0.0
        %416 = vmatpush.msra.mxu0 0.0
        %417 = vmatpush.msra.mxu0 0.0
        %418 = vmatpush.msra.mxu0 0.0
        %419 = vmatpush.msra.mxu0 0.0
        %420 = vmatpush.msra.mxu0 0.0
        %421 = vmatpush.msra.mxu0 0.0
        %422 = vmatpush.msra.mxu0 0.0
        %423 = vmatpush.msra.mxu0 0.0
        %424 = vmatpush.msra.mxu0 %v404
        %425 = vmatmul.f32.gmra.mxu0 %v407
        %v426 = vpop.f32.mrf.mxu0
        %v427 = vadd.f32 0.0, %v426
        %428 = vdwg.mxu0
        %v429 = vxor.u32 %v427, 2147483648
        %v430 = vmul.f32 %v429, 1.442695
        %v431 = vpow.pop %v430
        %v432 = vadd.f32 %v431, 1.0
        %v433 = vrcp.pop %v432
        %v434 = vmul.f32 %v432, %v433
        %v435 = vsub.f32 1.0, %v434
        %v436 = vmul.f32 %v433, %v435
        %v437 = vadd.f32 %v433, %v436
        %vm438 = vweird.f32 %v432
        %vm439 = vweird.f32 %v433
        %vm440 = vmor %vm438, %vm439
        %v441 = vsel %vm440, %v433, %v437
        %v442 = vand.u32 2147483647, %v432
        %vm443 = vcmp.eq.f32.partialorder %v442, 8.507059e+37
        %v444 = vand.u32 %v432, 2147483648
        %v445 = vor.u32 1.1754944e-38, %v444
        %v446 = vsel %vm443, %v445, %v441
        %v447 = vmul.f32 1.0, %v446
        %v448 = vperm.slane %v447, 0
        %v449 = vlaneseq
        %v450 = vshrl.u32 %v449, 7
        %452 = vset.pattern.permute.xlu0 %v450
        %453 = vperm.xlu0 %452, %v448
        %v454 = vpop.permute.xlu0 %453
        %v455 = vlaneseq
        %v456 = vshrl.u32 %v455, 7
        %v457 = vadd.s32 %v456, 8
        %458 = vset.pattern.permute.xlu0 %v457
        %459 = vperm.xlu0 %458, %v448
        %v460 = vpop.permute.xlu0 %459
        %v461 = vlaneseq
        %v462 = vshrl.u32 %v461, 7
        %v463 = vadd.s32 %v462, 16
        %464 = vset.pattern.permute.xlu0 %v463
        %465 = vperm.xlu0 %464, %v448
        %v466 = vpop.permute.xlu0 %465
        %v467 = vlaneseq
        %v468 = vshrl.u32 %v467, 7
        %v469 = vadd.s32 %v468, 24
        %470 = vset.pattern.permute.xlu0 %v469
        %471 = vperm.xlu0 %470, %v448
        %v472 = vpop.permute.xlu0 %471
        %v473 = vlaneseq
        %v474 = vshrl.u32 %v473, 7
        %v475 = vadd.s32 %v474, 32
        %476 = vset.pattern.permute.xlu0 %v475
        %477 = vperm.xlu0 %476, %v448
        %v478 = vpop.permute.xlu0 %477
        %v479 = vlaneseq
        %v480 = vshrl.u32 %v479, 7
        %v481 = vadd.s32 %v480, 40
        %482 = vset.pattern.permute.xlu0 %v481
        %483 = vperm.xlu0 %482, %v448
        %v484 = vpop.permute.xlu0 %483
        %v485 = vlaneseq
        %v486 = vshrl.u32 %v485, 7
        %v487 = vadd.s32 %v486, 48
        %488 = vset.pattern.permute.xlu0 %v487
        %489 = vperm.xlu0 %488, %v448
        %v490 = vpop.permute.xlu0 %489
        %v491 = vlaneseq
        %v492 = vshrl.u32 %v491, 7
        %v493 = vadd.s32 %v492, 56
        %494 = vset.pattern.permute.xlu0 %v493
        %495 = vperm.xlu0 %494, %v448
        %v496 = vpop.permute.xlu0 %495
        %v497 = vlaneseq
        %v498 = vshrl.u32 %v497, 7
        %v499 = vadd.s32 %v498, 64
        %500 = vset.pattern.permute.xlu0 %v499
        %501 = vperm.xlu0 %500, %v448
        %v502 = vpop.permute.xlu0 %501
        %v503 = vlaneseq
        %v504 = vshrl.u32 %v503, 7
        %v505 = vadd.s32 %v504, 72
        %506 = vset.pattern.permute.xlu0 %v505
        %507 = vperm.xlu0 %506, %v448
        %v508 = vpop.permute.xlu0 %507
        %v509 = vlaneseq
        %v510 = vshrl.u32 %v509, 7
        %v511 = vadd.s32 %v510, 80
        %512 = vset.pattern.permute.xlu0 %v511
        %513 = vperm.xlu0 %512, %v448
        %v514 = vpop.permute.xlu0 %513
        %v515 = vlaneseq
        %v516 = vshrl.u32 %v515, 7
        %v517 = vadd.s32 %v516, 88
        %518 = vset.pattern.permute.xlu0 %v517
        %519 = vperm.xlu0 %518, %v448
        %v520 = vpop.permute.xlu0 %519
        %v521 = vlaneseq
        %v522 = vshrl.u32 %v521, 7
        %v523 = vadd.s32 %v522, 96
        %524 = vset.pattern.permute.xlu0 %v523
        %525 = vperm.xlu0 %524, %v448
        %v526 = vpop.permute.xlu0 %525
        %v527 = vlaneseq
        %v528 = vshrl.u32 %v527, 7
        %v529 = vadd.s32 %v528, 104
        %530 = vset.pattern.permute.xlu0 %v529
        %531 = vperm.xlu0 %530, %v448
        %v532 = vpop.permute.xlu0 %531
        %v533 = vlaneseq
        %v534 = vshrl.u32 %v533, 7
        %v535 = vadd.s32 %v534, 112
        %536 = vset.pattern.permute.xlu0 %v535
        %537 = vperm.xlu0 %536, %v448
        %v538 = vpop.permute.xlu0 %537
        %v539 = vlaneseq
        %v540 = vshrl.u32 %v539, 7
        %v541 = vadd.s32 %v540, 120
        %542 = vset.pattern.permute.xlu0 %v541
        %543 = vperm.xlu0 %542, %v448
        %v544 = vpop.permute.xlu0 %543
        %v545 = vmul.f32 %v191, %v454
        %v546 = vmul.f32 %v192, %v454
        %v547 = vmul.f32 %v193, %v460
        %v548 = vmul.f32 %v194, %v460
        %v549 = vmul.f32 %v195, %v466
        %v550 = vmul.f32 %v196, %v466
        %v551 = vmul.f32 %v197, %v472
        %v552 = vmul.f32 %v198, %v472
        %v553 = vmul.f32 %v199, %v478
        %v554 = vmul.f32 %v200, %v478
        %v555 = vmul.f32 %v201, %v484
        %v556 = vmul.f32 %v202, %v484
        %v557 = vmul.f32 %v203, %v490
        %v558 = vmul.f32 %v204, %v490
        %v559 = vmul.f32 %v205, %v496
        %v560 = vmul.f32 %v206, %v496
        %v561 = vmul.f32 %v207, %v502
        %v562 = vmul.f32 %v208, %v502
        %v563 = vmul.f32 %v209, %v508
        %v564 = vmul.f32 %v210, %v508
        %v565 = vmul.f32 %v211, %v514
        %v566 = vmul.f32 %v212, %v514
        %v567 = vmul.f32 %v213, %v520
        %v568 = vmul.f32 %v214, %v520
        %v569 = vmul.f32 %v215, %v526
        %v570 = vmul.f32 %v216, %v526
        %v571 = vmul.f32 %v217, %v532
        %v572 = vmul.f32 %v218, %v532
        %v573 = vmul.f32 %v219, %v538
        %v574 = vmul.f32 %v220, %v538
        %v575 = vmul.f32 %v221, %v544
        %v576 = vmul.f32 %v222, %v544
        %577 = vst [vmem:[%s190] sm:$0xff] %v545
        %578 = vst [vmem:[%s190 + $0x8] sm:$0xff] %v546
        %579 = vst [vmem:[%s190 + $0x10] sm:$0xff] %v547
        %580 = vst [vmem:[%s190 + $0x18] sm:$0xff] %v548
        %581 = vst [vmem:[%s190 + $0x20] sm:$0xff] %v549
        %582 = vst [vmem:[%s190 + $0x28] sm:$0xff] %v550
        %583 = vst [vmem:[%s190 + $0x30] sm:$0xff] %v551
        %584 = vst [vmem:[%s190 + $0x38] sm:$0xff] %v552
        %585 = vst [vmem:[%s190 + $0x40] sm:$0xff] %v553
        %586 = vst [vmem:[%s190 + $0x48] sm:$0xff] %v554
        %587 = vst [vmem:[%s190 + $0x50] sm:$0xff] %v555
        %588 = vst [vmem:[%s190 + $0x58] sm:$0xff] %v556
        %589 = vst [vmem:[%s190 + $0x60] sm:$0xff] %v557
        %590 = vst [vmem:[%s190 + $0x68] sm:$0xff] %v558
        %591 = vst [vmem:[%s190 + $0x70] sm:$0xff] %v559
        %592 = vst [vmem:[%s190 + $0x78] sm:$0xff] %v560
        %593 = vst [vmem:[%s190 + $0x80] sm:$0xff] %v561
        %594 = vst [vmem:[%s190 + $0x88] sm:$0xff] %v562
        %595 = vst [vmem:[%s190 + $0x90] sm:$0xff] %v563
        %596 = vst [vmem:[%s190 + $0x98] sm:$0xff] %v564
        %597 = vst [vmem:[%s190 + $0xa0] sm:$0xff] %v565
        %598 = vst [vmem:[%s190 + $0xa8] sm:$0xff] %v566
        %599 = vst [vmem:[%s190 + $0xb0] sm:$0xff] %v567
        %600 = vst [vmem:[%s190 + $0xb8] sm:$0xff] %v568
        %601 = vst [vmem:[%s190 + $0xc0] sm:$0xff] %v569
        %602 = vst [vmem:[%s190 + $0xc8] sm:$0xff] %v570
        %603 = vst [vmem:[%s190 + $0xd0] sm:$0xff] %v571
        %604 = vst [vmem:[%s190 + $0xd8] sm:$0xff] %v572
        %605 = vst [vmem:[%s190 + $0xe0] sm:$0xff] %v573
        %606 = vst [vmem:[%s190 + $0xe8] sm:$0xff] %v574
        %607 = vst [vmem:[%s190 + $0xf0] sm:$0xff] %v575
        %608 = vst [vmem:[%s190 + $0xf8] sm:$0xff] %v576
        %s609 = sand.u32 %s96, 1
        %s610 = scalar_lea.sflag [#allocation4], %s609
        %s611 = sand.u32 %s96, 1
        %s612 = smul.addr %s611, 256
        %s613 = scalar_lea.vmem [#allocation5], %s612
        // Predicated region
        $region37: #{tpu_custom_call.1} parent=31 // pred_check
          %p614 = pneg %p106
        $region38: #{tpu_custom_call.1} parent=31 // pred_check_branch
          %616 = sbr.rel (%p614) target = $region40
        $region39: #{tpu_custom_call.1} parent=31 // pred_region
          %618 = vsyncadd %s610, 0
          %s619 = smul.addr %s20, 32
          %s620 = smul.addr %s619, 8
          %s621 = scalar_lea.hbm %s3, %s620
          %s622 = sshll.u32 %s613, 4
          %s623 = int_to_ptr.vmem [resolvable:$true] %s622
          %s624 = sshll.u32 %s621, 4
          %s625 = int_to_ptr.hbm [resolvable:$true] %s624
          %630 = dma.vmem_to_hbm [thread:$0]  %s623, 4096, %s625, %s610, 256, 256, 16
        $region40: #{tpu_custom_call.1} parent=31 // pred_fallthru
          _
      $region32: #{tpu_custom_call.1} parent=5 // pred_fallthru
        _
      %p631 = scmp.le.s32.totalorder 2, %s15
      // Predicated region
      $region41: #{tpu_custom_call.1} parent=5 // pred_check
        %p632 = pneg %p631
      $region42: #{tpu_custom_call.1} parent=5 // pred_check_branch
        %634 = sbr.rel (%p632) target = $region44
      $region43: #{tpu_custom_call.1} parent=5 // pred_region
        %s635 = ssub.s32 %s15, 2
        // Predicated region
        $region45: #{tpu_custom_call.1} parent=43 // pred_check
          %p636 = pneg %p112
        $region46: #{tpu_custom_call.1} parent=43 // pred_check_branch
          %638 = sbr.rel (%p636) target = $region48
        $region47: #{tpu_custom_call.1} parent=43 // pred_region
          %s639 = sand.u32 %s97, 1
          %s640 = scalar_lea.sflag [#allocation4], %s639
          %s641 = sand.u32 %s97, 1
          %s642 = smul.addr %s641, 256
          %s643 = scalar_lea.vmem [#allocation5], %s642
          %645 = dma.done %s640, 4096
        $region48: #{tpu_custom_call.1} parent=43 // pred_fallthru
          _
      $region44: #{tpu_custom_call.1} parent=5 // pred_fallthru
        _
    $region6: #{tpu_custom_call.1} parent=1 // loop_footer
      %s19 = sadd.s32 1, %s15
    $region7: #{tpu_custom_call.1} parent=1 // loop_footer_branch
      %14 = sbr.rel target = $region3
    $region8: #{tpu_custom_call.1} parent=1 // loop_exit
      _
    %646 = vsyncpa [#allocation3], 1
    %s647 = scalar_lea.sflag [#allocation3], 1
    %648 = vsyncpa %s647, 1
    %649 = vsyncpa [#allocation4], 1
    %s650 = scalar_lea.sflag [#allocation4], 1
    %651 = vsyncpa %s650, 1

</llo_original>
